<compile_context>
chip_gen: v5e
topology: v5e:2x2
jax: 0.10.0
libtpu: 0.0.40
codegen_flags: <defaults>
</compile_context>

<pallas_src>
import functools

import jax
import jax.numpy as jnp
from jax.experimental import pallas as pl
from jax.experimental.pallas import tpu as pltpu

MPD_KERNEL_SIZE = 5   # model_config.mpd_kernel_size
MPD_STRIDE = 3        # model_config.mpd_stride
LRELU_SLOPE = 0.1

_LANE = 128
_SUBLANE = 8
_MAX_TM = 1024
_TILE_VMEM_BUDGET = 28 * 1024 * 1024   # per-call tile working set (double-buffered)
_VMEM_LIMIT_BYTES = 48 * 1024 * 1024   # explicit scoped-VMEM limit (<= v7x 64 MiB/TC)


def _round_up(x, m):
    return (x + m - 1) // m * m


# ----------------------------- Pallas kernels -------------------------------
def _conv_rows_kernel(x_ref, w_ref, b_ref, o_ref, *, slope, apply_act, use_mxu):
    # x_ref: (tm, Kc) bf16 im2col rows; w_ref: (Kc, Np) bf16 (full, VMEM-resident);
    # b_ref: (1, Np) f32; o_ref: (tm, Np) bf16/f32.
    if use_mxu:
        y = jnp.dot(x_ref[...], w_ref[...], preferred_element_type=jnp.float32)
    else:
        # Tiny contraction (first layer, Kc=5): 5 rank-1 VPU FMAs, skip the MXU.
        xv = x_ref[...].astype(jnp.float32)
        wv = w_ref[...].astype(jnp.float32)
        y = jnp.zeros((xv.shape[0], wv.shape[1]), jnp.float32)
        for k in range(xv.shape[1]):
            y = y + xv[:, k:k + 1] * wv[k:k + 1, :]
    y = y + b_ref[...]
    if apply_act:
        y = jnp.where(y >= 0.0, y, slope * y)
    o_ref[...] = y.astype(o_ref.dtype)


def _pertap_conv_kernel(x_ref, w_ref, b_ref, o_ref, *, taps, hout, slope, apply_act):
    # Per-tap shifted-window accumulation (stride-1 conv, no im2col expansion).
    # x_ref: (1, H+2p, Cin) bf16; w_ref: (K, Cin, Cout) bf16 (resident);
    # b_ref: (1, Cout) f32; o_ref: (1, Hout, Cout).
    xv = x_ref[0]
    acc = None
    for k in range(taps):
        part = jnp.dot(xv[k:k + hout, :], w_ref[k], preferred_element_type=jnp.float32)
        acc = part if acc is None else acc + part
    y = acc + b_ref[...]
    if apply_act:
        y = jnp.where(y >= 0.0, y, slope * y)
    o_ref[0] = y.astype(o_ref.dtype)


def _final_conv_kernel(x_ref, w_ref, b_ref, o_ref, *, taps, hout):
    # Final Cout=1 conv on the VPU/XLU: per-tap elementwise multiply + lane reduction.
    # x_ref: (1, H+2p, Cin) bf16; w_ref: (K, 1, Cin) f32; b_ref: (1, 1) f32;
    # o_ref: (1, Hout, 1) f32.
    xv = x_ref[0].astype(jnp.float32)
    acc = None
    for k in range(taps):
        part = jnp.sum(xv[k:k + hout, :] * w_ref[k], axis=-1, keepdims=True)
        acc = part if acc is None else acc + part
    o_ref[0] = (acc + b_ref[...]).astype(o_ref.dtype)


# ------------------------------ tiling helpers -------------------------------
def _pick_tile_m(m_rows, kc, n_pad, out_bytes):
    m8 = _round_up(m_rows, _SUBLANE)

    def need(tm):
        return (2 * tm * kc * 2          # x tile, double-buffered, bf16
                + 2 * kc * n_pad * 2     # resident weight (budget 2x to be safe)
                + 2 * n_pad * 4          # bias
                + 2 * tm * n_pad * out_bytes)

    if m8 <= _MAX_TM and need(m8) <= _TILE_VMEM_BUDGET:
        return m8                        # single full-dim block over (padded) M
    for tm in (1024, 512, 256, 128, 64, 32, 16):
        if tm <= m8 and need(tm) <= _TILE_VMEM_BUDGET:
            return tm
    return 16 if m8 >= 16 else m8


def _pertap_fits(hp, hout, c_act, cout, taps, w_bytes, out_bytes):
    need = (2 * hp * c_act * 2
            + 2 * taps * c_act * cout * w_bytes
            + 2 * cout * 4
            + 2 * hout * cout * out_bytes)
    return need <= _TILE_VMEM_BUDGET


# ------------------------------- conv wrappers --------------------------------
def _im2col(x, kernel_size, stride, pad):
    # x: (B, P, H, C) -> (B*P*Hout, K*C); column order k*C + c (contiguous reshape).
    B, P, H, C = x.shape
    xp = jnp.pad(x, ((0, 0), (0, 0), (pad, pad), (0, 0)))
    Hp = H + 2 * pad
    Hout = (Hp - kernel_size) // stride + 1
    h_idx = jnp.arange(Hout)[:, None] * stride + jnp.arange(kernel_size)[None, :]
    cols = xp[:, :, h_idx, :]                       # (B, P, Hout, K, C)
    return cols.reshape(B * P * Hout, kernel_size * C), Hout


def conv_im2col(x, weight, bias, stride, pad, apply_act, out_dtype=jnp.bfloat16):
    """im2col -> (M, Kc) @ (Kc, Np) with the full weight VMEM-resident (1-D grid over M).

    Returns (B, P, Hout, Np) where Np >= Cout (padded channels are exact zeros)."""
    B, P, H, c_act = x.shape
    cout, cin, K, _ = weight.shape
    if c_act > cin:                      # absorb zero-padded channels from previous layer
        weight = jnp.pad(weight, ((0, 0), (0, c_act - cin), (0, 0), (0, 0)))

    x_col, hout = _im2col(x.astype(jnp.bfloat16), K, stride, pad)
    M, kc = x_col.shape
    n_pad = max(_round_up(cout, _LANE), _LANE)       # lane-dense output stores

    w_flat = jnp.transpose(weight[..., 0], (2, 1, 0)).reshape(K * c_act, cout)
    w_flat = w_flat.astype(jnp.bfloat16)
    b_row = bias.astype(jnp.float32).reshape(1, cout)
    if n_pad != cout:
        w_flat = jnp.pad(w_flat, ((0, 0), (0, n_pad - cout)))
        b_row = jnp.pad(b_row, ((0, 0), (0, n_pad - cout)))

    out_bytes = jnp.dtype(out_dtype).itemsize
    tm = _pick_tile_m(M, kc, n_pad, out_bytes)
    m_pad = _round_up(M, tm)
    if m_pad != M:
        x_col = jnp.pad(x_col, ((0, m_pad - M), (0, 0)))

    use_mxu = kc >= 16
    cost = pl.CostEstimate(
        flops=2 * m_pad * kc * n_pad,
        transcendentals=0,
        bytes_accessed=m_pad * kc * 2 + kc * n_pad * 2 + n_pad * 4
        + m_pad * n_pad * out_bytes,
    )

    y = pl.pallas_call(
        functools.partial(_conv_rows_kernel, slope=LRELU_SLOPE,
                          apply_act=apply_act, use_mxu=use_mxu),
        out_shape=jax.ShapeDtypeStruct((m_pad, n_pad), out_dtype),
        grid=(m_pad // tm,),
        in_specs=[
            pl.BlockSpec((tm, kc), lambda i: (i, 0)),
            pl.BlockSpec((kc, n_pad), lambda i: (0, 0)),   # weight resident across M
            pl.BlockSpec((1, n_pad), lambda i: (0, 0)),
        ],
        out_specs=pl.BlockSpec((tm, n_pad), lambda i: (i, 0)),
        compiler_params=pltpu.CompilerParams(
            dimension_semantics=("parallel",),
            vmem_limit_bytes=_VMEM_LIMIT_BYTES,
        ),
        cost_estimate=cost,
    )(x_col, w_flat, b_row)

    return y[:M].reshape(B, P, hout, n_pad)


def conv_stride1_pertap(x, weight, bias, pad, apply_act, out_dtype=jnp.bfloat16):
    """Stride-1 conv via per-tap shifted-window accumulation (no im2col expansion)."""
    B, P, H, c_act = x.shape
    cout, cin, K, _ = weight.shape
    if c_act > cin:
        weight = jnp.pad(weight, ((0, 0), (0, c_act - cin), (0, 0), (0, 0)))
    hout = H + 2 * pad - K + 1
    hp = H + 2 * pad

    x3 = jnp.pad(x.astype(jnp.bfloat16).reshape(B * P, H, c_act),
                 ((0, 0), (pad, pad), (0, 0)))
    w_taps = jnp.transpose(weight[..., 0], (2, 1, 0)).astype(jnp.bfloat16)  # (K,Cin,Cout)
    b_row = bias.astype(jnp.float32).reshape(1, cout)

    bp = B * P
    out_bytes = jnp.dtype(out_dtype).itemsize
    cost = pl.CostEstimate(
        flops=2 * bp * hout * c_act * cout * K,
        transcendentals=0,
        bytes_accessed=bp * hp * c_act * 2 + K * c_act * cout * 2 + cout * 4
        + bp * hout * cout * out_bytes,
    )

    y = pl.pallas_call(
        functools.partial(_pertap_conv_kernel, taps=K, hout=hout,
                          slope=LRELU_SLOPE, apply_act=apply_act),
        out_shape=jax.ShapeDtypeStruct((bp, hout, cout), out_dtype),
        grid=(bp,),
        in_specs=[
            pl.BlockSpec((1, hp, c_act), lambda i: (i, 0, 0)),
            pl.BlockSpec((K, c_act, cout), lambda i: (0, 0, 0)),   # resident
            pl.BlockSpec((1, cout), lambda i: (0, 0)),
        ],
        out_specs=pl.BlockSpec((1, hout, cout), lambda i: (i, 0, 0)),
        compiler_params=pltpu.CompilerParams(
            dimension_semantics=("parallel",),
            vmem_limit_bytes=_VMEM_LIMIT_BYTES,
        ),
        cost_estimate=cost,
    )(x3, w_taps, b_row)

    return y.reshape(B, P, hout, cout)


def conv_final_pertap(x, weight, bias, pad):
    """Final Cout=1 conv: per-tap VPU multiply + lane reduction (no padded MXU work)."""
    B, P, H, c_act = x.shape
    cout, cin, K, _ = weight.shape   # cout == 1
    if c_act > cin:
        weight = jnp.pad(weight, ((0, 0), (0, c_act - cin), (0, 0), (0, 0)))
    hout = H + 2 * pad - K + 1
    hp = H + 2 * pad

    x3 = jnp.pad(x.astype(jnp.bfloat16).reshape(B * P, H, c_act),
                 ((0, 0), (pad, pad), (0, 0)))
    w_taps = jnp.transpose(weight[..., 0], (2, 0, 1)).astype(jnp.float32)   # (K, 1, Cin)
    b_sc = bias.astype(jnp.float32).reshape(1, 1)

    bp = B * P
    cost = pl.CostEstimate(
        flops=2 * bp * hout * c_act * K,
        transcendentals=0,
        bytes_accessed=bp * hp * c_act * 2 + K * c_act * 4 + 4 + bp * hout * 4,
    )

    y = pl.pallas_call(
        functools.partial(_final_conv_kernel, taps=K, hout=hout),
        out_shape=jax.ShapeDtypeStruct((bp, hout, 1), jnp.float32),
        grid=(bp,),
        in_specs=[
            pl.BlockSpec((1, hp, c_act), lambda i: (i, 0, 0)),
            pl.BlockSpec((K, 1, c_act), lambda i: (0, 0, 0)),      # resident
            pl.BlockSpec((1, 1), lambda i: (0, 0)),
        ],
        out_specs=pl.BlockSpec((1, hout, 1), lambda i: (i, 0, 0)),
        compiler_params=pltpu.CompilerParams(
            dimension_semantics=("parallel",),
            vmem_limit_bytes=_VMEM_LIMIT_BYTES,
        ),
        cost_estimate=cost,
    )(x3, w_taps, b_sc)

    return y.reshape(B, P, hout, 1)


# --------------------------------- params ------------------------------------
def init_params(key):
    """Deterministic synthetic parameters; weight_norm folded into effective weights."""
    n_channels = [1] + [2 ** (5 + i) for i in range(1, 5)] + [1024]  # [1,64,128,256,512,1024]

    def make_wn_conv(key, cout, cin, k):
        kv, kg, kb = jax.random.split(key, 3)
        v = jax.random.normal(kv, (cout, cin, k, 1), jnp.float32) * 0.01
        g = jnp.abs(jax.random.normal(kg, (cout, 1, 1, 1), jnp.float32)) + 0.5
        norm = jnp.sqrt(jnp.sum(v * v, axis=(1, 2, 3), keepdims=True))
        w = g * v / norm                                   # weight_norm reparam
        b = jax.random.normal(kb, (cout,), jnp.float32) * 0.01
        return w, b

    params = []
    for i in range(1, len(n_channels)):
        key, sub = jax.random.split(key)
        params.append(make_wn_conv(sub, n_channels[i], n_channels[i - 1], MPD_KERNEL_SIZE))
    key, sub = jax.random.split(key)
    final = make_wn_conv(sub, 1, n_channels[-1], 3)
    return params, final


# --------------------------------- forward ------------------------------------
def sub_discriminator_p_forward(x, params, final, p):
    # x: (B, n_ch=1, T)  -- PyTorch layout
    B, C, T = x.shape
    if T % p != 0:
        # reflect pad requires (p - T % p) < T, same constraint as torch reflect pad
        x = jnp.pad(x, ((0, 0), (0, 0), (0, p - T % p)), mode="reflect")
        T = x.shape[-1]
    # torch: x.view(B, C, T//p, p) (NCHW, H=T//p, W=p) -> working layout (B, P, H, C)
    x = x.reshape(B, C, T // p, p)
    x = jnp.transpose(x, (0, 3, 2, 1)).astype(jnp.bfloat16)

    fmap = []
    n_layers = len(params)
    for i, (w, b) in enumerate(params):
        stride = 1 if i == n_layers - 1 else MPD_STRIDE   # last conv layer has stride (1,1)
        cout = w.shape[0]
        if stride == 1:
            Bc, Pc, Hc, Cc = x.shape
            K = w.shape[2]
            if _pertap_fits(Hc + 4, Hc, Cc, cout, K, w_bytes=2, out_bytes=2):
                x = conv_stride1_pertap(x, w, b, pad=2, apply_act=True)
            else:
                x = conv_im2col(x, w, b, stride=1, pad=2, apply_act=True)
        else:
            x = conv_im2col(x, w, b, stride=stride, pad=2, apply_act=True)
        # fmap in NCHW, real channels only, returned f32 (values bf16-accurate)
        fmap.append(jnp.transpose(x[..., :cout], (0, 3, 2, 1)).astype(jnp.float32))

    wf, bf = final
    Bc, Pc, Hc, Cc = x.shape
    if _pertap_fits(Hc + 2, Hc, Cc, 1, wf.shape[2], w_bytes=4, out_bytes=4):
        y = conv_final_pertap(x, wf, bf, pad=1)
    else:
        y = conv_im2col(x, wf, bf, stride=1, pad=1, apply_act=False,
                        out_dtype=jnp.float32)[..., :1]
    x_nchw = jnp.transpose(y, (0, 3, 2, 1))               # (B, 1, Hf, P)
    fmap.append(x_nchw)

    out = x_nchw.reshape(B, -1)                           # torch.flatten(x, 1, -1)
    return out, fmap


if __name__ == "__main__":
    key = jax.random.PRNGKey(0)
    kx, kp = jax.random.split(key)

    p = 2
    # small input: batch=2, n_ch=1 (first conv expects 1 channel), time=63
    # (63 % 2 != 0, so the reflect-pad branch is exercised)
    x = jax.random.normal(kx, (2, 1, 63), jnp.float32)
    params, final = init_params(kp)

    out, fmap = sub_discriminator_p_forward(x, params, final, p)
    out = jax.block_until_ready(out)
    for f in fmap:
        jax.block_until_ready(f)

    print("KERNEL_OK")
</pallas_src>

<mosaic_0001>
module attributes {stable_mosaic.version = 11 : i64} {
  func.func @_conv_rows_kernel(%arg0: i32, %arg1: memref<48x5xbf16, #tpu.memory_space<vmem>>, %arg2: memref<5x128xbf16, #tpu.memory_space<vmem>>, %arg3: memref<1x128xf32, #tpu.memory_space<vmem>>, %arg4: memref<48x128xbf16, #tpu.memory_space<vmem>>) attributes {dimension_semantics = [#tpu.dimension_semantics<parallel>], iteration_bounds = array<i64: 1>, scalar_prefetch = 0 : i64, scratch_operands = 0 : i64, tpu.core_type = #tpu.core_type<tc>, window_params = [{transform_indices = @transform_0, window_bounds = array<i64: 48, 5>}, {pipeline_mode = #tpu.pipeline_mode<synchronous>, transform_indices = @transform_1, window_bounds = array<i64: 5, 128>}, {pipeline_mode = #tpu.pipeline_mode<synchronous>, transform_indices = @transform_2, window_bounds = array<i64: 1, 128>}, {transform_indices = @transform_3, window_bounds = array<i64: 48, 128>}]} {
    %c0 = arith.constant 0 : index
    %c0_0 = arith.constant 0 : index
    %0 = vector.load %arg1[%c0, %c0_0] : memref<48x5xbf16, #tpu.memory_space<vmem>>, vector<48x5xbf16>
    %1 = arith.extf %0 : vector<48x5xbf16> to vector<48x5xf32>
    %c0_1 = arith.constant 0 : index
    %c0_2 = arith.constant 0 : index
    %2 = vector.load %arg2[%c0_1, %c0_2] : memref<5x128xbf16, #tpu.memory_space<vmem>>, vector<5x128xbf16>
    %3 = arith.extf %2 : vector<5x128xbf16> to vector<5x128xf32>
    %cst = arith.constant 0.000000e+00 : f32
    %4 = vector.broadcast %cst : f32 to vector<48x128xf32>
    %5 = vector.extract_strided_slice %1 {offsets = [0, 0], sizes = [48, 1], strides = [1, 1]} : vector<48x5xf32> to vector<48x1xf32>
    %6 = vector.extract_strided_slice %3 {offsets = [0, 0], sizes = [1, 128], strides = [1, 1]} : vector<5x128xf32> to vector<1x128xf32>
    %7 = vector.broadcast %5 : vector<48x1xf32> to vector<48x128xf32>
    %8 = vector.broadcast %6 : vector<1x128xf32> to vector<48x128xf32>
    %9 = arith.mulf %7, %8 : vector<48x128xf32>
    %10 = arith.addf %4, %9 : vector<48x128xf32>
    %11 = vector.extract_strided_slice %1 {offsets = [0, 1], sizes = [48, 1], strides = [1, 1]} : vector<48x5xf32> to vector<48x1xf32>
    %12 = vector.extract_strided_slice %3 {offsets = [1, 0], sizes = [1, 128], strides = [1, 1]} : vector<5x128xf32> to vector<1x128xf32>
    %13 = vector.broadcast %11 : vector<48x1xf32> to vector<48x128xf32>
    %14 = vector.broadcast %12 : vector<1x128xf32> to vector<48x128xf32>
    %15 = arith.mulf %13, %14 : vector<48x128xf32>
    %16 = arith.addf %10, %15 : vector<48x128xf32>
    %17 = vector.extract_strided_slice %1 {offsets = [0, 2], sizes = [48, 1], strides = [1, 1]} : vector<48x5xf32> to vector<48x1xf32>
    %18 = vector.extract_strided_slice %3 {offsets = [2, 0], sizes = [1, 128], strides = [1, 1]} : vector<5x128xf32> to vector<1x128xf32>
    %19 = vector.broadcast %17 : vector<48x1xf32> to vector<48x128xf32>
    %20 = vector.broadcast %18 : vector<1x128xf32> to vector<48x128xf32>
    %21 = arith.mulf %19, %20 : vector<48x128xf32>
    %22 = arith.addf %16, %21 : vector<48x128xf32>
    %23 = vector.extract_strided_slice %1 {offsets = [0, 3], sizes = [48, 1], strides = [1, 1]} : vector<48x5xf32> to vector<48x1xf32>
    %24 = vector.extract_strided_slice %3 {offsets = [3, 0], sizes = [1, 128], strides = [1, 1]} : vector<5x128xf32> to vector<1x128xf32>
    %25 = vector.broadcast %23 : vector<48x1xf32> to vector<48x128xf32>
    %26 = vector.broadcast %24 : vector<1x128xf32> to vector<48x128xf32>
    %27 = arith.mulf %25, %26 : vector<48x128xf32>
    %28 = arith.addf %22, %27 : vector<48x128xf32>
    %29 = vector.extract_strided_slice %1 {offsets = [0, 4], sizes = [48, 1], strides = [1, 1]} : vector<48x5xf32> to vector<48x1xf32>
    %30 = vector.extract_strided_slice %3 {offsets = [4, 0], sizes = [1, 128], strides = [1, 1]} : vector<5x128xf32> to vector<1x128xf32>
    %31 = vector.broadcast %29 : vector<48x1xf32> to vector<48x128xf32>
    %32 = vector.broadcast %30 : vector<1x128xf32> to vector<48x128xf32>
    %33 = arith.mulf %31, %32 : vector<48x128xf32>
    %34 = arith.addf %28, %33 : vector<48x128xf32>
    %c0_3 = arith.constant 0 : index
    %c0_4 = arith.constant 0 : index
    %35 = vector.load %arg3[%c0_3, %c0_4] : memref<1x128xf32, #tpu.memory_space<vmem>>, vector<1x128xf32>
    %36 = vector.broadcast %35 : vector<1x128xf32> to vector<48x128xf32>
    %37 = arith.addf %34, %36 : vector<48x128xf32>
    %cst_5 = arith.constant 0.000000e+00 : f32
    %38 = vector.broadcast %cst_5 : f32 to vector<48x128xf32>
    %39 = arith.cmpf oge, %37, %38 : vector<48x128xf32>
    %cst_6 = arith.constant 1.000000e-01 : f32
    %40 = vector.broadcast %cst_6 : f32 to vector<48x128xf32>
    %41 = arith.mulf %40, %37 : vector<48x128xf32>
    %42 = arith.select %39, %37, %41 : vector<48x128xi1>, vector<48x128xf32>
    %43 = arith.truncf %42 : vector<48x128xf32> to vector<48x128xbf16>
    %c0_7 = arith.constant 0 : index
    %c0_8 = arith.constant 0 : index
    %44 = vector.load %arg4[%c0_7, %c0_8] : memref<48x128xbf16, #tpu.memory_space<vmem>>, vector<48x128xbf16>
    tpu.vector_store %arg4[%c0_7, %c0_8], %43 {strides = array<i32>} : memref<48x128xbf16, #tpu.memory_space<vmem>>, vector<48x128xbf16>,
    return
  }
  func.func @transform_0(%arg0: i32) -> (i32, i32) {
    %c0_i32 = arith.constant 0 : i32
    %c0_i32_0 = arith.constant 0 : i32
    return %arg0, %c0_i32 : i32, i32
  }
  func.func @transform_1(%arg0: i32) -> (i32, i32) {
    %c0_i32 = arith.constant 0 : i32
    %c0_i32_0 = arith.constant 0 : i32
    %c0_i32_1 = arith.constant 0 : i32
    return %c0_i32, %c0_i32_0 : i32, i32
  }
  func.func @transform_2(%arg0: i32) -> (i32, i32) {
    %c0_i32 = arith.constant 0 : i32
    %c0_i32_0 = arith.constant 0 : i32
    %c0_i32_1 = arith.constant 0 : i32
    return %c0_i32, %c0_i32_0 : i32, i32
  }
  func.func @transform_3(%arg0: i32) -> (i32, i32) {
    %c0_i32 = arith.constant 0 : i32
    %c0_i32_0 = arith.constant 0 : i32
    return %arg0, %c0_i32 : i32, i32
  }
}

</mosaic_0001>

<llo_original>
// kernel: tpu_custom_call.1
$region0: #{tpu_custom_call.1}
  #allocation0 [shape = 'u32[]', space=smem, size = 0x4, offset = 0x4, fixed_abs, tag = 'smem constant byte address 0x4 - core index']
  #allocation1 [shape = 'u32[72,128]{1,0:T(1,128)}', space=vmem, size = 0x9000, scoped, tag = 'internal scratch']
  %s0 = inlined_call_operand.vmem [shape: bf16[48,5], index: 0, kind: input, shape index: {}]
  %s1 = inlined_call_operand.vmem [shape: bf16[5,128], index: 1, kind: input, shape index: {}]
  %s2 = inlined_call_operand.vmem [shape: f32[1,128], index: 2, kind: input, shape index: {}]
  %s3 = inlined_call_operand.hbm [shape: bf16[48,128], index: 3, kind: output, shape index: {}]
  %s4 = sld [smem:[#allocation0]]
  $region22: #{tpu_custom_call.1} parent=0
    _
  %s6 = ssub.s32 1, %s4
  %s7 = scalar_select 0, %s6, %s4
  $region1: #{tpu_custom_call.1} parent=0
    #allocation2 [shape = 'u8[12288]{0}', space=vmem, size = 0x3000, scoped, tag = 'output window, operand 0, single buffered']
    #allocation3 [shape = 's32[1]{0}', space=sflag, size = 0x4, scoped, tag = 'scoped memory for tpu_custom_call.1']
    %8 = vsyncpa [#allocation3], 0
    // Predicated region
    $region2: #{tpu_custom_call.1} parent=1 // pred_check
      _
    $region3: #{tpu_custom_call.1} parent=1 // pred_check_branch
      %10 = sbr.rel (0) target = $region5
    $region4: #{tpu_custom_call.1} parent=1 // pred_region
      _
    $region5: #{tpu_custom_call.1} parent=1 // pred_fallthru
      _
    // Predicated region
    $region6: #{tpu_custom_call.1} parent=1 // pred_check
      _
    $region7: #{tpu_custom_call.1} parent=1 // pred_check_branch
      %12 = sbr.rel (0) target = $region9
    $region8: #{tpu_custom_call.1} parent=1 // pred_region
      _
    $region9: #{tpu_custom_call.1} parent=1 // pred_fallthru
      _
    // Predicated region
    $region10: #{tpu_custom_call.1} parent=1 // pred_check
      _
    $region11: #{tpu_custom_call.1} parent=1 // pred_check_branch
      %14 = sbr.rel (0) target = $region13
    $region12: #{tpu_custom_call.1} parent=1 // pred_region
      _
    $region13: #{tpu_custom_call.1} parent=1 // pred_fallthru
      _
    %v15 = vld [vmem:[%s0] sm:$0xf]
    %v16 = vld [vmem:[%s0 + $0x4] sm:$0xf]
    %v17 = vld [vmem:[%s0 + $0x8] sm:$0xf]
    %v18 = vld [vmem:[%s0 + $0xc] sm:$0xf]
    %v19 = vld [vmem:[%s0 + $0x10] sm:$0xf]
    %v20 = vld [vmem:[%s0 + $0x14] sm:$0xf]
    %v21 = vunpack.c.l.bf16 %v15
    %v22 = vunpack.c.l.bf16 %v16
    %v23 = vunpack.c.l.bf16 %v17
    %v24 = vunpack.c.l.bf16 %v18
    %v25 = vunpack.c.l.bf16 %v19
    %v26 = vunpack.c.l.bf16 %v20
    %v27 = vld [vmem:[%s1] sm:$0x7]
    %v28 = vunpack.c.l.bf16 %v27
    %30 = vset.pattern.permute.xlu0 0
    %31 = vperm.xlu0 %30, %v21
    %v32 = vpop.permute.xlu0 %31
    %35 = vset.pattern.permute.xlu0 0
    %36 = vperm.xlu0 %35, %v22
    %v37 = vpop.permute.xlu0 %36
    %40 = vset.pattern.permute.xlu0 0
    %41 = vperm.xlu0 %40, %v23
    %v42 = vpop.permute.xlu0 %41
    %45 = vset.pattern.permute.xlu0 0
    %46 = vperm.xlu0 %45, %v24
    %v47 = vpop.permute.xlu0 %46
    %50 = vset.pattern.permute.xlu0 0
    %51 = vperm.xlu0 %50, %v25
    %v52 = vpop.permute.xlu0 %51
    %55 = vset.pattern.permute.xlu0 0
    %56 = vperm.xlu0 %55, %v26
    %v57 = vpop.permute.xlu0 %56
    %v59 = vperm.slane %v28, 0
    %v60 = vmul.f32 %v32, %v59
    %v61 = vmul.f32 %v37, %v59
    %v62 = vmul.f32 %v42, %v59
    %v63 = vmul.f32 %v47, %v59
    %v64 = vmul.f32 %v52, %v59
    %v65 = vmul.f32 %v57, %v59
    %v66 = vadd.f32 %v60, 0.0
    %v67 = vadd.f32 %v61, 0.0
    %v68 = vadd.f32 %v62, 0.0
    %v69 = vadd.f32 %v63, 0.0
    %v70 = vadd.f32 %v64, 0.0
    %v71 = vadd.f32 %v65, 0.0
    %72 = vset.pattern.permute.xlu0 1
    %73 = vperm.xlu0 %72, %v21
    %v74 = vpop.permute.xlu0 %73
    %76 = vset.pattern.permute.xlu0 1
    %77 = vperm.xlu0 %76, %v22
    %v78 = vpop.permute.xlu0 %77
    %80 = vset.pattern.permute.xlu0 1
    %81 = vperm.xlu0 %80, %v23
    %v82 = vpop.permute.xlu0 %81
    %84 = vset.pattern.permute.xlu0 1
    %85 = vperm.xlu0 %84, %v24
    %v86 = vpop.permute.xlu0 %85
    %88 = vset.pattern.permute.xlu0 1
    %89 = vperm.xlu0 %88, %v25
    %v90 = vpop.permute.xlu0 %89
    %92 = vset.pattern.permute.xlu0 1
    %93 = vperm.xlu0 %92, %v26
    %v94 = vpop.permute.xlu0 %93
    %v96 = vperm.slane %v28, 1
    %v97 = vmul.f32 %v74, %v96
    %v98 = vmul.f32 %v78, %v96
    %v99 = vmul.f32 %v82, %v96
    %v100 = vmul.f32 %v86, %v96
    %v101 = vmul.f32 %v90, %v96
    %v102 = vmul.f32 %v94, %v96
    %v103 = vadd.f32 %v66, %v97
    %v104 = vadd.f32 %v67, %v98
    %v105 = vadd.f32 %v68, %v99
    %v106 = vadd.f32 %v69, %v100
    %v107 = vadd.f32 %v70, %v101
    %v108 = vadd.f32 %v71, %v102
    %109 = vset.pattern.permute.xlu0 2
    %110 = vperm.xlu0 %109, %v21
    %v111 = vpop.permute.xlu0 %110
    %113 = vset.pattern.permute.xlu0 2
    %114 = vperm.xlu0 %113, %v22
    %v115 = vpop.permute.xlu0 %114
    %117 = vset.pattern.permute.xlu0 2
    %118 = vperm.xlu0 %117, %v23
    %v119 = vpop.permute.xlu0 %118
    %121 = vset.pattern.permute.xlu0 2
    %122 = vperm.xlu0 %121, %v24
    %v123 = vpop.permute.xlu0 %122
    %125 = vset.pattern.permute.xlu0 2
    %126 = vperm.xlu0 %125, %v25
    %v127 = vpop.permute.xlu0 %126
    %129 = vset.pattern.permute.xlu0 2
    %130 = vperm.xlu0 %129, %v26
    %v131 = vpop.permute.xlu0 %130
    %v133 = vperm.slane %v28, 2
    %v134 = vmul.f32 %v111, %v133
    %v135 = vmul.f32 %v115, %v133
    %v136 = vmul.f32 %v119, %v133
    %v137 = vmul.f32 %v123, %v133
    %v138 = vmul.f32 %v127, %v133
    %v139 = vmul.f32 %v131, %v133
    %v140 = vadd.f32 %v103, %v134
    %v141 = vadd.f32 %v104, %v135
    %v142 = vadd.f32 %v105, %v136
    %v143 = vadd.f32 %v106, %v137
    %v144 = vadd.f32 %v107, %v138
    %v145 = vadd.f32 %v108, %v139
    %146 = vset.pattern.permute.xlu0 3
    %147 = vperm.xlu0 %146, %v21
    %v148 = vpop.permute.xlu0 %147
    %150 = vset.pattern.permute.xlu0 3
    %151 = vperm.xlu0 %150, %v22
    %v152 = vpop.permute.xlu0 %151
    %154 = vset.pattern.permute.xlu0 3
    %155 = vperm.xlu0 %154, %v23
    %v156 = vpop.permute.xlu0 %155
    %158 = vset.pattern.permute.xlu0 3
    %159 = vperm.xlu0 %158, %v24
    %v160 = vpop.permute.xlu0 %159
    %162 = vset.pattern.permute.xlu0 3
    %163 = vperm.xlu0 %162, %v25
    %v164 = vpop.permute.xlu0 %163
    %166 = vset.pattern.permute.xlu0 3
    %167 = vperm.xlu0 %166, %v26
    %v168 = vpop.permute.xlu0 %167
    %v170 = vperm.slane %v28, 3
    %v171 = vmul.f32 %v148, %v170
    %v172 = vmul.f32 %v152, %v170
    %v173 = vmul.f32 %v156, %v170
    %v174 = vmul.f32 %v160, %v170
    %v175 = vmul.f32 %v164, %v170
    %v176 = vmul.f32 %v168, %v170
    %v177 = vadd.f32 %v140, %v171
    %v178 = vadd.f32 %v141, %v172
    %v179 = vadd.f32 %v142, %v173
    %v180 = vadd.f32 %v143, %v174
    %v181 = vadd.f32 %v144, %v175
    %v182 = vadd.f32 %v145, %v176
    %183 = vset.pattern.permute.xlu0 4
    %184 = vperm.xlu0 %183, %v21
    %v185 = vpop.permute.xlu0 %184
    %187 = vset.pattern.permute.xlu0 4
    %188 = vperm.xlu0 %187, %v22
    %v189 = vpop.permute.xlu0 %188
    %191 = vset.pattern.permute.xlu0 4
    %192 = vperm.xlu0 %191, %v23
    %v193 = vpop.permute.xlu0 %192
    %195 = vset.pattern.permute.xlu0 4
    %196 = vperm.xlu0 %195, %v24
    %v197 = vpop.permute.xlu0 %196
    %199 = vset.pattern.permute.xlu0 4
    %200 = vperm.xlu0 %199, %v25
    %v201 = vpop.permute.xlu0 %200
    %203 = vset.pattern.permute.xlu0 4
    %204 = vperm.xlu0 %203, %v26
    %v205 = vpop.permute.xlu0 %204
    %v207 = vperm.slane %v28, 4
    %v208 = vmul.f32 %v185, %v207
    %v209 = vmul.f32 %v189, %v207
    %v210 = vmul.f32 %v193, %v207
    %v211 = vmul.f32 %v197, %v207
    %v212 = vmul.f32 %v201, %v207
    %v213 = vmul.f32 %v205, %v207
    %v214 = vadd.f32 %v177, %v208
    %v215 = vadd.f32 %v178, %v209
    %v216 = vadd.f32 %v179, %v210
    %v217 = vadd.f32 %v180, %v211
    %v218 = vadd.f32 %v181, %v212
    %v219 = vadd.f32 %v182, %v213
    %v220 = vld [vmem:[%s2] sm:$0x1]
    %v222 = vperm.slane %v220, 0
    %v224 = vadd.f32 %v214, %v222
    %v225 = vadd.f32 %v215, %v222
    %v226 = vadd.f32 %v216, %v222
    %v227 = vadd.f32 %v217, %v222
    %v228 = vadd.f32 %v218, %v222
    %v229 = vadd.f32 %v219, %v222
    %vm230 = vcmp.ge.f32.partialorder %v224, 0.0
    %vm231 = vcmp.ge.f32.partialorder %v225, 0.0
    %vm232 = vcmp.ge.f32.partialorder %v226, 0.0
    %vm233 = vcmp.ge.f32.partialorder %v227, 0.0
    %vm234 = vcmp.ge.f32.partialorder %v228, 0.0
    %vm235 = vcmp.ge.f32.partialorder %v229, 0.0
    %v236 = vmul.f32 %v224, 0.1
    %v237 = vmul.f32 %v225, 0.1
    %v238 = vmul.f32 %v226, 0.1
    %v239 = vmul.f32 %v227, 0.1
    %v240 = vmul.f32 %v228, 0.1
    %v241 = vmul.f32 %v229, 0.1
    %v242 = vsel %vm230, %v224, %v236
    %v243 = vsel %vm231, %v225, %v237
    %v244 = vsel %vm232, %v226, %v238
    %v245 = vsel %vm233, %v227, %v239
    %v246 = vsel %vm234, %v228, %v240
    %v247 = vsel %vm235, %v229, %v241
    %v248 = vpack.c.bf16 %v242, %v242
    %v249 = vpack.c.bf16 %v243, %v243
    %v250 = vpack.c.bf16 %v244, %v244
    %v251 = vpack.c.bf16 %v245, %v245
    %v252 = vpack.c.bf16 %v246, %v246
    %v253 = vpack.c.bf16 %v247, %v247
    %254 = vst [vmem:[#allocation2] sm:$0xf] %v248
    %255 = vst [vmem:[#allocation2 + $0x4] sm:$0xf] %v249
    %256 = vst [vmem:[#allocation2 + $0x8] sm:$0xf] %v250
    %257 = vst [vmem:[#allocation2 + $0xc] sm:$0xf] %v251
    %258 = vst [vmem:[#allocation2 + $0x10] sm:$0xf] %v252
    %259 = vst [vmem:[#allocation2 + $0x14] sm:$0xf] %v253
    // Predicated region
    $region14: #{tpu_custom_call.1} parent=1 // pred_check
      _
    $region15: #{tpu_custom_call.1} parent=1 // pred_check_branch
      %261 = sbr.rel (0) target = $region17
    $region16: #{tpu_custom_call.1} parent=1 // pred_region
      %263 = vsyncadd [#allocation3], 0
      %s264 = sshll.u32 [#allocation2], 4
      %s265 = int_to_ptr.vmem [resolvable:$true] %s264
      %s266 = sshll.u32 %s3, 4
      %s267 = int_to_ptr.hbm [resolvable:$true] %s266
      %272 = dma.vmem_to_hbm [thread:$0]  %s265, 384, %s267, [#allocation3], 64, 64, 4
    $region17: #{tpu_custom_call.1} parent=1 // pred_fallthru
      _
    // Predicated region
    $region18: #{tpu_custom_call.1} parent=1 // pred_check
      _
    $region19: #{tpu_custom_call.1} parent=1 // pred_check_branch
      %274 = sbr.rel (0) target = $region21
    $region20: #{tpu_custom_call.1} parent=1 // pred_region
      %276 = dma.done [#allocation3], 384
    $region21: #{tpu_custom_call.1} parent=1 // pred_fallthru
      _
    %277 = vsyncpa [#allocation3], 1

</llo_original>
